<compile_context>
chip_gen: v7x
topology: tpu7x:2x2x1
jax: 0.10.0
libtpu: 0.0.40
codegen_flags: <defaults>
</compile_context>

<pallas_src>
import functools

import jax
import jax.numpy as jnp
from jax.experimental import pallas as pl
from jax.experimental.pallas import tpu as pltpu

LANE = 128     # last-dim vreg width
SUBLANE = 8    # second-to-last vreg width (f32)


def _round_up(x, m):
    return (x + m - 1) // m * m


def _mlp_fused_kernel(*refs, num_linear, compute_dtype):
    """refs = (x_ref, w0_ref, b0_ref, w1_ref, b1_ref, ..., o_ref).

    x_ref:  (TB, D0_pad)           activations tile (f32)
    wi_ref: (Di_pad, Di+1_pad)     W^T, bf16, zero-padded
    bi_ref: (1, Di+1_pad)          bias, f32, zero-padded
    o_ref:  (TB, Dlast_pad)
    """
    x_ref = refs[0]
    o_ref = refs[-1]
    wb_refs = refs[1:-1]

    h = x_ref[...]  # f32 activations, stay in VMEM/vregs across layers
    for i in range(num_linear):
        w_ref = wb_refs[2 * i]
        b_ref = wb_refs[2 * i + 1]
        # MXU matmul: bf16 x bf16 -> f32 accumulation.
        y = jnp.dot(
            h.astype(compute_dtype),
            w_ref[...],
            preferred_element_type=jnp.float32,
        )
        # Bias-add / ReLU epilogue in f32 on the VPU.
        y = y + b_ref[...]
        if i < num_linear - 1:
            y = jnp.maximum(y, 0.0)
        h = y
    o_ref[...] = h.astype(o_ref.dtype)


def init_mlp_params(key, in_size, out_size, mlp_size, num_layers, dtype=jnp.float32):
    """PyTorch-like nn.Linear init. We store W^T (in, out) and b (out,)."""
    dims = [in_size] + [mlp_size] * num_layers + [out_size]
    params = []
    for i in range(len(dims) - 1):
        fan_in, fan_out = dims[i], dims[i + 1]
        key, kw, kb = jax.random.split(key, 3)
        bound = 1.0 / float(fan_in) ** 0.5
        w_t = jax.random.uniform(kw, (fan_in, fan_out), dtype, -bound, bound)
        b = jax.random.uniform(kb, (fan_out,), dtype, -bound, bound)
        params.append((w_t, b))
    return params


def mlp_forward(params, x, *, compute_dtype=jnp.bfloat16, tile_batch=512):
    """Fused MLP forward: one pallas_call for the whole network."""
    batch, in_size = x.shape
    out_size = params[-1][0].shape[1]

    # Padded (lane-dense) feature dims per layer boundary.
    dims = [in_size] + [w.shape[1] for w, _ in params]
    padded = [_round_up(d, LANE) for d in dims]

    # Batch tiling: TB rows per grid step, batch padded to a multiple of TB.
    pb = _round_up(batch, SUBLANE)
    tb = min(tile_batch, pb)
    pb = _round_up(pb, tb)

    # Zero-pad the input activations (padded cols contribute 0 through every
    # layer because weights/biases are zero-padded too).
    xp = jnp.zeros((pb, padded[0]), x.dtype).at[:batch, :in_size].set(x)

    args = [xp]
    in_specs = [pl.BlockSpec((tb, padded[0]), lambda i: (i, 0))]
    for li, (w, b) in enumerate(params):
        kin, kout = w.shape
        kp, npad = padded[li], padded[li + 1]
        wp = (
            jnp.zeros((kp, npad), compute_dtype)
            .at[:kin, :kout]
            .set(w.astype(compute_dtype))
        )
        bp = (
            jnp.zeros((1, npad), jnp.float32)
            .at[0, :kout]
            .set(b.astype(jnp.float32).reshape(-1))
        )
        args += [wp, bp]
        in_specs += [
            pl.BlockSpec((kp, npad), lambda i: (0, 0)),   # weights: not re-DMA'd per tile
            pl.BlockSpec((1, npad), lambda i: (0, 0)),
        ]

    out_pad = padded[-1]
    num_linear = len(params)
    kernel = functools.partial(
        _mlp_fused_kernel, num_linear=num_linear, compute_dtype=compute_dtype
    )

    flops = sum(2 * pb * padded[i] * padded[i + 1] for i in range(num_linear))
    bytes_accessed = sum(int(a.size) * a.dtype.itemsize for a in args)
    bytes_accessed += pb * out_pad * x.dtype.itemsize

    y = pl.pallas_call(
        kernel,
        out_shape=jax.ShapeDtypeStruct((pb, out_pad), x.dtype),
        grid=(pb // tb,),
        in_specs=in_specs,
        out_specs=pl.BlockSpec((tb, out_pad), lambda i: (i, 0)),
        compiler_params=pltpu.CompilerParams(
            dimension_semantics=("parallel",),
        ),
        cost_estimate=pl.CostEstimate(
            flops=flops, transcendentals=0, bytes_accessed=bytes_accessed
        ),
    )(*args)

    # Slice padded output back to the logical shape.
    return y[:batch, :out_size]


def mlp_reference(params, x, compute_dtype=jnp.bfloat16):
    """Pure-JAX reference with the same dtype policy as the kernel."""
    h = x
    n = len(params)
    for i, (w, b) in enumerate(params):
        y = jnp.dot(
            h.astype(compute_dtype),
            w.astype(compute_dtype),
            preferred_element_type=jnp.float32,
        ) + b.astype(jnp.float32)
        if i < n - 1:
            y = jnp.maximum(y, 0.0)
        h = y
    return h.astype(x.dtype)


if __name__ == "__main__":
    in_size, out_size, mlp_size, num_layers = 16, 8, 32, 2
    batch = 8

    key = jax.random.PRNGKey(0)
    key, kx = jax.random.split(key)
    x = jax.random.normal(kx, (batch, in_size), dtype=jnp.float32)

    params = init_mlp_params(key, in_size, out_size, mlp_size, num_layers)

    forward = jax.jit(mlp_forward)
    y = forward(params, x)
    y = jax.block_until_ready(y)

    y_ref = mlp_reference(params, x)

    assert y.shape == (batch, out_size), y.shape
    assert jnp.all(jnp.isfinite(y))
    assert jnp.allclose(y, y_ref, rtol=1e-4, atol=1e-4), float(
        jnp.max(jnp.abs(y - y_ref))
    )
    print("KERNEL_OK")
</pallas_src>

<mosaic_0001>
module attributes {stable_mosaic.version = 11 : i64} {
  func.func @_mlp_fused_kernel(%arg0: i32, %arg1: memref<8x128xf32, #tpu.memory_space<vmem>>, %arg2: memref<128x128xbf16, #tpu.memory_space<vmem>>, %arg3: memref<1x128xf32, #tpu.memory_space<vmem>>, %arg4: memref<128x128xbf16, #tpu.memory_space<vmem>>, %arg5: memref<1x128xf32, #tpu.memory_space<vmem>>, %arg6: memref<128x128xbf16, #tpu.memory_space<vmem>>, %arg7: memref<1x128xf32, #tpu.memory_space<vmem>>, %arg8: memref<8x128xf32, #tpu.memory_space<vmem>>) attributes {dimension_semantics = [#tpu.dimension_semantics<parallel>], iteration_bounds = array<i64: 1>, scalar_prefetch = 0 : i64, scratch_operands = 0 : i64, tpu.core_type = #tpu.core_type<tc>, window_params = [{transform_indices = @transform_0, window_bounds = array<i64: 8, 128>}, {pipeline_mode = #tpu.pipeline_mode<synchronous>, transform_indices = @transform_1, window_bounds = array<i64: 128, 128>}, {pipeline_mode = #tpu.pipeline_mode<synchronous>, transform_indices = @transform_2, window_bounds = array<i64: 1, 128>}, {pipeline_mode = #tpu.pipeline_mode<synchronous>, transform_indices = @transform_3, window_bounds = array<i64: 128, 128>}, {pipeline_mode = #tpu.pipeline_mode<synchronous>, transform_indices = @transform_4, window_bounds = array<i64: 1, 128>}, {pipeline_mode = #tpu.pipeline_mode<synchronous>, transform_indices = @transform_5, window_bounds = array<i64: 128, 128>}, {pipeline_mode = #tpu.pipeline_mode<synchronous>, transform_indices = @transform_6, window_bounds = array<i64: 1, 128>}, {transform_indices = @transform_7, window_bounds = array<i64: 8, 128>}]} {
    %c0 = arith.constant 0 : index
    %c0_0 = arith.constant 0 : index
    %0 = vector.load %arg1[%c0, %c0_0] : memref<8x128xf32, #tpu.memory_space<vmem>>, vector<8x128xf32>
    %1 = arith.truncf %0 : vector<8x128xf32> to vector<8x128xbf16>
    %c0_1 = arith.constant 0 : index
    %c0_2 = arith.constant 0 : index
    %2 = vector.load %arg2[%c0_1, %c0_2] : memref<128x128xbf16, #tpu.memory_space<vmem>>, vector<128x128xbf16>
    %cst = arith.constant dense<0.000000e+00> : vector<8x128xf32>
    %3 = tpu.matmul %1, %2, %cst {dimension_numbers = #tpu.dot_dimension_numbers<[1], [0], [0], [1], [0, 0, 1, 1], [], []>} : vector<8x128xbf16>, vector<128x128xbf16>, vector<8x128xf32> -> vector<8x128xf32>
    %c0_3 = arith.constant 0 : index
    %c0_4 = arith.constant 0 : index
    %4 = vector.load %arg3[%c0_3, %c0_4] : memref<1x128xf32, #tpu.memory_space<vmem>>, vector<1x128xf32>
    %5 = vector.broadcast %4 : vector<1x128xf32> to vector<8x128xf32>
    %6 = arith.addf %3, %5 : vector<8x128xf32>
    %cst_5 = arith.constant 0.000000e+00 : f32
    %7 = vector.broadcast %cst_5 : f32 to vector<8x128xf32>
    %8 = arith.maximumf %6, %7 : vector<8x128xf32>
    %9 = arith.truncf %8 : vector<8x128xf32> to vector<8x128xbf16>
    %c0_6 = arith.constant 0 : index
    %c0_7 = arith.constant 0 : index
    %10 = vector.load %arg4[%c0_6, %c0_7] : memref<128x128xbf16, #tpu.memory_space<vmem>>, vector<128x128xbf16>
    %cst_8 = arith.constant dense<0.000000e+00> : vector<8x128xf32>
    %11 = tpu.matmul %9, %10, %cst_8 {dimension_numbers = #tpu.dot_dimension_numbers<[1], [0], [0], [1], [0, 0, 1, 1], [], []>} : vector<8x128xbf16>, vector<128x128xbf16>, vector<8x128xf32> -> vector<8x128xf32>
    %c0_9 = arith.constant 0 : index
    %c0_10 = arith.constant 0 : index
    %12 = vector.load %arg5[%c0_9, %c0_10] : memref<1x128xf32, #tpu.memory_space<vmem>>, vector<1x128xf32>
    %13 = vector.broadcast %12 : vector<1x128xf32> to vector<8x128xf32>
    %14 = arith.addf %11, %13 : vector<8x128xf32>
    %cst_11 = arith.constant 0.000000e+00 : f32
    %15 = vector.broadcast %cst_11 : f32 to vector<8x128xf32>
    %16 = arith.maximumf %14, %15 : vector<8x128xf32>
    %17 = arith.truncf %16 : vector<8x128xf32> to vector<8x128xbf16>
    %c0_12 = arith.constant 0 : index
    %c0_13 = arith.constant 0 : index
    %18 = vector.load %arg6[%c0_12, %c0_13] : memref<128x128xbf16, #tpu.memory_space<vmem>>, vector<128x128xbf16>
    %cst_14 = arith.constant dense<0.000000e+00> : vector<8x128xf32>
    %19 = tpu.matmul %17, %18, %cst_14 {dimension_numbers = #tpu.dot_dimension_numbers<[1], [0], [0], [1], [0, 0, 1, 1], [], []>} : vector<8x128xbf16>, vector<128x128xbf16>, vector<8x128xf32> -> vector<8x128xf32>
    %c0_15 = arith.constant 0 : index
    %c0_16 = arith.constant 0 : index
    %20 = vector.load %arg7[%c0_15, %c0_16] : memref<1x128xf32, #tpu.memory_space<vmem>>, vector<1x128xf32>
    %21 = vector.broadcast %20 : vector<1x128xf32> to vector<8x128xf32>
    %22 = arith.addf %19, %21 : vector<8x128xf32>
    %c0_17 = arith.constant 0 : index
    %c0_18 = arith.constant 0 : index
    %23 = vector.load %arg8[%c0_17, %c0_18] : memref<8x128xf32, #tpu.memory_space<vmem>>, vector<8x128xf32>
    tpu.vector_store %arg8[%c0_17, %c0_18], %22 {strides = array<i32>} : memref<8x128xf32, #tpu.memory_space<vmem>>, vector<8x128xf32>,
    return
  }
  func.func @transform_0(%arg0: i32) -> (i32, i32) {
    %c0_i32 = arith.constant 0 : i32
    %c0_i32_0 = arith.constant 0 : i32
    return %arg0, %c0_i32 : i32, i32
  }
  func.func @transform_1(%arg0: i32) -> (i32, i32) {
    %c0_i32 = arith.constant 0 : i32
    %c0_i32_0 = arith.constant 0 : i32
    %c0_i32_1 = arith.constant 0 : i32
    return %c0_i32, %c0_i32_0 : i32, i32
  }
  func.func @transform_2(%arg0: i32) -> (i32, i32) {
    %c0_i32 = arith.constant 0 : i32
    %c0_i32_0 = arith.constant 0 : i32
    %c0_i32_1 = arith.constant 0 : i32
    return %c0_i32, %c0_i32_0 : i32, i32
  }
  func.func @transform_3(%arg0: i32) -> (i32, i32) {
    %c0_i32 = arith.constant 0 : i32
    %c0_i32_0 = arith.constant 0 : i32
    %c0_i32_1 = arith.constant 0 : i32
    return %c0_i32, %c0_i32_0 : i32, i32
  }
  func.func @transform_4(%arg0: i32) -> (i32, i32) {
    %c0_i32 = arith.constant 0 : i32
    %c0_i32_0 = arith.constant 0 : i32
    %c0_i32_1 = arith.constant 0 : i32
    return %c0_i32, %c0_i32_0 : i32, i32
  }
  func.func @transform_5(%arg0: i32) -> (i32, i32) {
    %c0_i32 = arith.constant 0 : i32
    %c0_i32_0 = arith.constant 0 : i32
    %c0_i32_1 = arith.constant 0 : i32
    return %c0_i32, %c0_i32_0 : i32, i32
  }
  func.func @transform_6(%arg0: i32) -> (i32, i32) {
    %c0_i32 = arith.constant 0 : i32
    %c0_i32_0 = arith.constant 0 : i32
    %c0_i32_1 = arith.constant 0 : i32
    return %c0_i32, %c0_i32_0 : i32, i32
  }
  func.func @transform_7(%arg0: i32) -> (i32, i32) {
    %c0_i32 = arith.constant 0 : i32
    %c0_i32_0 = arith.constant 0 : i32
    return %arg0, %c0_i32 : i32, i32
  }
}

</mosaic_0001>

<llo_original>
// kernel: mlp_forward.1
$region0: #{mlp_forward.1}
  #allocation0 [shape = 'u32[]', space=smem, size = 0x4, offset = 0x4, fixed_abs, tag = 'smem constant byte address 0x4 - core index']
  #allocation1 [shape = 'u32[144,128]{1,0:T(1,128)}', space=vmem, size = 0x12000, scoped, tag = 'internal scratch']
  %s0 = inlined_call_operand.vmem [shape: f32[8,128], index: 0, kind: input, shape index: {}]
  %s1 = inlined_call_operand.vmem [shape: bf16[128,128], index: 1, kind: input, shape index: {}]
  %s2 = inlined_call_operand.vmem [shape: f32[1,128], index: 2, kind: input, shape index: {}]
  %s3 = inlined_call_operand.vmem [shape: bf16[128,128], index: 3, kind: input, shape index: {}]
  %s4 = inlined_call_operand.vmem [shape: f32[1,128], index: 4, kind: input, shape index: {}]
  %s5 = inlined_call_operand.vmem [shape: bf16[128,128], index: 5, kind: input, shape index: {}]
  %s6 = inlined_call_operand.vmem [shape: f32[1,128], index: 6, kind: input, shape index: {}]
  %s7 = inlined_call_operand.hbm [shape: f32[8,128], index: 7, kind: output, shape index: {}]
  %s8 = sld [smem:[#allocation0]]
  $region38: #{mlp_forward.1} parent=0
    _
  %s10 = ssub.s32 1, %s8
  %s11 = scalar_select 0, %s10, %s8
  $region1: #{mlp_forward.1} parent=0
    #allocation2 [shape = 'u8[4096]{0}', space=vmem, size = 0x1000, scoped, tag = 'output window, operand 0, single buffered']
    #allocation3 [shape = 's32[1]{0}', space=sflag, size = 0x4, scoped, tag = 'scoped memory for mlp_forward.1']
    %12 = vsyncpa [#allocation3], 0
    // Predicated region
    $region2: #{mlp_forward.1} parent=1 // pred_check
      _
    $region3: #{mlp_forward.1} parent=1 // pred_check_branch
      %14 = sbr.rel (0) target = $region5
    $region4: #{mlp_forward.1} parent=1 // pred_region
      _
    $region5: #{mlp_forward.1} parent=1 // pred_fallthru
      _
    // Predicated region
    $region6: #{mlp_forward.1} parent=1 // pred_check
      _
    $region7: #{mlp_forward.1} parent=1 // pred_check_branch
      %16 = sbr.rel (0) target = $region9
    $region8: #{mlp_forward.1} parent=1 // pred_region
      _
    $region9: #{mlp_forward.1} parent=1 // pred_fallthru
      _
    // Predicated region
    $region10: #{mlp_forward.1} parent=1 // pred_check
      _
    $region11: #{mlp_forward.1} parent=1 // pred_check_branch
      %18 = sbr.rel (0) target = $region13
    $region12: #{mlp_forward.1} parent=1 // pred_region
      _
    $region13: #{mlp_forward.1} parent=1 // pred_fallthru
      _
    // Predicated region
    $region14: #{mlp_forward.1} parent=1 // pred_check
      _
    $region15: #{mlp_forward.1} parent=1 // pred_check_branch
      %20 = sbr.rel (0) target = $region17
    $region16: #{mlp_forward.1} parent=1 // pred_region
      _
    $region17: #{mlp_forward.1} parent=1 // pred_fallthru
      _
    // Predicated region
    $region18: #{mlp_forward.1} parent=1 // pred_check
      _
    $region19: #{mlp_forward.1} parent=1 // pred_check_branch
      %22 = sbr.rel (0) target = $region21
    $region20: #{mlp_forward.1} parent=1 // pred_region
      _
    $region21: #{mlp_forward.1} parent=1 // pred_fallthru
      _
    // Predicated region
    $region22: #{mlp_forward.1} parent=1 // pred_check
      _
    $region23: #{mlp_forward.1} parent=1 // pred_check_branch
      %24 = sbr.rel (0) target = $region25
    $region24: #{mlp_forward.1} parent=1 // pred_region
      _
    $region25: #{mlp_forward.1} parent=1 // pred_fallthru
      _
    // Predicated region
    $region26: #{mlp_forward.1} parent=1 // pred_check
      _
    $region27: #{mlp_forward.1} parent=1 // pred_check_branch
      %26 = sbr.rel (0) target = $region29
    $region28: #{mlp_forward.1} parent=1 // pred_region
      _
    $region29: #{mlp_forward.1} parent=1 // pred_fallthru
      _
    %v28 = vld [vmem:[%s0] sm:$0xff]
    %v29 = vpack.c.bf16 %v28, %v28
    %v30 = vld [vmem:[%s1] sm:$0xf]
    %v31 = vld [vmem:[%s1 + $0x4] sm:$0xf]
    %v32 = vld [vmem:[%s1 + $0x8] sm:$0xf]
    %v33 = vld [vmem:[%s1 + $0xc] sm:$0xf]
    %v34 = vld [vmem:[%s1 + $0x10] sm:$0xf]
    %v35 = vld [vmem:[%s1 + $0x14] sm:$0xf]
    %v36 = vld [vmem:[%s1 + $0x18] sm:$0xf]
    %v37 = vld [vmem:[%s1 + $0x1c] sm:$0xf]
    %v38 = vld [vmem:[%s1 + $0x20] sm:$0xf]
    %v39 = vld [vmem:[%s1 + $0x24] sm:$0xf]
    %v40 = vld [vmem:[%s1 + $0x28] sm:$0xf]
    %v41 = vld [vmem:[%s1 + $0x2c] sm:$0xf]
    %v42 = vld [vmem:[%s1 + $0x30] sm:$0xf]
    %v43 = vld [vmem:[%s1 + $0x34] sm:$0xf]
    %v44 = vld [vmem:[%s1 + $0x38] sm:$0xf]
    %v45 = vld [vmem:[%s1 + $0x3c] sm:$0xf]
    %v46 = vld [vmem:[%s2] sm:$0x1]
    %v48 = vlaneseq
    %v49 = vshrl.u32 %v48, 7
    %v50 = vsub.s32 0, %v49
    %v51 = vrot.slane %v46, %v50
    %v69 = vunpack.c.l.b16 %v30
    %v70 = vunpack.c.l.b16 %v31
    %v71 = vunpack.c.l.b16 %v32
    %v72 = vunpack.c.l.b16 %v33
    %v73 = vunpack.c.l.b16 %v34
    %v74 = vunpack.c.l.b16 %v35
    %v75 = vunpack.c.l.b16 %v36
    %v76 = vunpack.c.l.b16 %v37
    %v77 = vunpack.c.l.b16 %v38
    %v78 = vunpack.c.l.b16 %v39
    %v79 = vunpack.c.l.b16 %v40
    %v80 = vunpack.c.l.b16 %v41
    %v81 = vunpack.c.l.b16 %v42
    %v82 = vunpack.c.l.b16 %v43
    %v83 = vunpack.c.l.b16 %v44
    %v84 = vunpack.c.l.b16 %v45
    %v85 = vpack.c.b16 %v70, %v69
    %v86 = vpack.c.b16 %v72, %v71
    %v87 = vpack.c.b16 %v74, %v73
    %v88 = vpack.c.b16 %v76, %v75
    %v89 = vpack.c.b16 %v78, %v77
    %v90 = vpack.c.b16 %v80, %v79
    %v91 = vpack.c.b16 %v82, %v81
    %v92 = vpack.c.b16 %v84, %v83
    %101 = vmatprep.subr.bf16.mxu0 0
    %102 = vmatpush1.bf16.msra.mxu0 %v85
    %103 = vmatprep.subr.bf16.mxu0 0
    %104 = vmatpush1.bf16.msra.mxu0 %v86
    %105 = vmatprep.subr.bf16.mxu0 0
    %106 = vmatpush1.bf16.msra.mxu0 %v87
    %107 = vmatprep.subr.bf16.mxu0 0
    %108 = vmatpush1.bf16.msra.mxu0 %v88
    %109 = vmatprep.subr.bf16.mxu0 0
    %110 = vmatpush1.bf16.msra.mxu0 %v89
    %111 = vmatprep.subr.bf16.mxu0 0
    %112 = vmatpush1.bf16.msra.mxu0 %v90
    %113 = vmatprep.subr.bf16.mxu0 0
    %114 = vmatpush1.bf16.msra.mxu0 %v91
    %115 = vmatprep.subr.bf16.mxu0 0
    %116 = vmatpush1.bf16.msra.mxu0 %v92
    %117 = vmatprep.subr.bf16.mxu0 0
    %118 = vmatpush1.bf16.msra.mxu0 0
    %119 = vmatprep.subr.bf16.mxu0 0
    %120 = vmatpush1.bf16.msra.mxu0 0
    %121 = vmatprep.subr.bf16.mxu0 0
    %122 = vmatpush1.bf16.msra.mxu0 0
    %123 = vmatprep.subr.bf16.mxu0 0
    %124 = vmatpush1.bf16.msra.mxu0 0
    %125 = vmatprep.subr.bf16.mxu0 0
    %126 = vmatpush1.bf16.msra.mxu0 0
    %127 = vmatprep.subr.bf16.mxu0 0
    %128 = vmatpush1.bf16.msra.mxu0 0
    %129 = vmatprep.subr.bf16.mxu0 0
    %130 = vmatpush1.bf16.msra.mxu0 0
    %131 = vmatprep.subr.bf16.mxu0 0
    %132 = vmatpush1.bf16.msra.mxu0 0
    %133 = vmatprep.mubr.bf16.mxu0 0
    %134 = vmatmul.mubr.bf16.gmra.mrb[0].mxu0 %v29
    %v135 = vpop.f32.mrb[0].mxu0
    %v136 = vadd.f32 %v51, %v135
    %v137 = vpop.f32.mrb[0].mxu0
    %v138 = vpop.f32.mrb[0].mxu0
    %v139 = vpop.f32.mrb[0].mxu0
    %140 = vdwg.mxu0
    %v141 = vmax.f32 %v136, 0.0
    %v142 = vpack.c.bf16 %v141, %v141
    %v143 = vld [vmem:[%s3] sm:$0xf]
    %v144 = vld [vmem:[%s3 + $0x4] sm:$0xf]
    %v145 = vld [vmem:[%s3 + $0x8] sm:$0xf]
    %v146 = vld [vmem:[%s3 + $0xc] sm:$0xf]
    %v147 = vld [vmem:[%s3 + $0x10] sm:$0xf]
    %v148 = vld [vmem:[%s3 + $0x14] sm:$0xf]
    %v149 = vld [vmem:[%s3 + $0x18] sm:$0xf]
    %v150 = vld [vmem:[%s3 + $0x1c] sm:$0xf]
    %v151 = vld [vmem:[%s3 + $0x20] sm:$0xf]
    %v152 = vld [vmem:[%s3 + $0x24] sm:$0xf]
    %v153 = vld [vmem:[%s3 + $0x28] sm:$0xf]
    %v154 = vld [vmem:[%s3 + $0x2c] sm:$0xf]
    %v155 = vld [vmem:[%s3 + $0x30] sm:$0xf]
    %v156 = vld [vmem:[%s3 + $0x34] sm:$0xf]
    %v157 = vld [vmem:[%s3 + $0x38] sm:$0xf]
    %v158 = vld [vmem:[%s3 + $0x3c] sm:$0xf]
    %v159 = vld [vmem:[%s4] sm:$0x1]
    %v161 = vlaneseq
    %v162 = vshrl.u32 %v161, 7
    %v163 = vsub.s32 0, %v162
    %v164 = vrot.slane %v159, %v163
    %v182 = vunpack.c.l.b16 %v143
    %v183 = vunpack.c.l.b16 %v144
    %v184 = vunpack.c.l.b16 %v145
    %v185 = vunpack.c.l.b16 %v146
    %v186 = vunpack.c.l.b16 %v147
    %v187 = vunpack.c.l.b16 %v148
    %v188 = vunpack.c.l.b16 %v149
    %v189 = vunpack.c.l.b16 %v150
    %v190 = vunpack.c.l.b16 %v151
    %v191 = vunpack.c.l.b16 %v152
    %v192 = vunpack.c.l.b16 %v153
    %v193 = vunpack.c.l.b16 %v154
    %v194 = vunpack.c.l.b16 %v155
    %v195 = vunpack.c.l.b16 %v156
    %v196 = vunpack.c.l.b16 %v157
    %v197 = vunpack.c.l.b16 %v158
    %v198 = vpack.c.b16 %v183, %v182
    %v199 = vpack.c.b16 %v185, %v184
    %v200 = vpack.c.b16 %v187, %v186
    %v201 = vpack.c.b16 %v189, %v188
    %v202 = vpack.c.b16 %v191, %v190
    %v203 = vpack.c.b16 %v193, %v192
    %v204 = vpack.c.b16 %v195, %v194
    %v205 = vpack.c.b16 %v197, %v196
    %214 = vmatprep.subr.bf16.mxu0 0
    %215 = vmatpush1.bf16.msra.mxu0 %v198
    %216 = vmatprep.subr.bf16.mxu0 0
    %217 = vmatpush1.bf16.msra.mxu0 %v199
    %218 = vmatprep.subr.bf16.mxu0 0
    %219 = vmatpush1.bf16.msra.mxu0 %v200
    %220 = vmatprep.subr.bf16.mxu0 0
    %221 = vmatpush1.bf16.msra.mxu0 %v201
    %222 = vmatprep.subr.bf16.mxu0 0
    %223 = vmatpush1.bf16.msra.mxu0 %v202
    %224 = vmatprep.subr.bf16.mxu0 0
    %225 = vmatpush1.bf16.msra.mxu0 %v203
    %226 = vmatprep.subr.bf16.mxu0 0
    %227 = vmatpush1.bf16.msra.mxu0 %v204
    %228 = vmatprep.subr.bf16.mxu0 0
    %229 = vmatpush1.bf16.msra.mxu0 %v205
    %230 = vmatprep.subr.bf16.mxu0 0
    %231 = vmatpush1.bf16.msra.mxu0 0
    %232 = vmatprep.subr.bf16.mxu0 0
    %233 = vmatpush1.bf16.msra.mxu0 0
    %234 = vmatprep.subr.bf16.mxu0 0
    %235 = vmatpush1.bf16.msra.mxu0 0
    %236 = vmatprep.subr.bf16.mxu0 0
    %237 = vmatpush1.bf16.msra.mxu0 0
    %238 = vmatprep.subr.bf16.mxu0 0
    %239 = vmatpush1.bf16.msra.mxu0 0
    %240 = vmatprep.subr.bf16.mxu0 0
    %241 = vmatpush1.bf16.msra.mxu0 0
    %242 = vmatprep.subr.bf16.mxu0 0
    %243 = vmatpush1.bf16.msra.mxu0 0
    %244 = vmatprep.subr.bf16.mxu0 0
    %245 = vmatpush1.bf16.msra.mxu0 0
    %246 = vmatprep.mubr.bf16.mxu0 0
    %247 = vmatmul.mubr.bf16.gmra.mrb[0].mxu0 %v142
    %v248 = vpop.f32.mrb[0].mxu0
    %v249 = vadd.f32 %v164, %v248
    %v250 = vpop.f32.mrb[0].mxu0
    %v251 = vpop.f32.mrb[0].mxu0
    %v252 = vpop.f32.mrb[0].mxu0
    %253 = vdwg.mxu0
    %v254 = vmax.f32 %v249, 0.0
    %v255 = vpack.c.bf16 %v254, %v254
    %v256 = vld [vmem:[%s5] sm:$0xf]
    %v257 = vld [vmem:[%s5 + $0x4] sm:$0xf]
    %v258 = vld [vmem:[%s5 + $0x8] sm:$0xf]
    %v259 = vld [vmem:[%s5 + $0xc] sm:$0xf]
    %v260 = vld [vmem:[%s5 + $0x10] sm:$0xf]
    %v261 = vld [vmem:[%s5 + $0x14] sm:$0xf]
    %v262 = vld [vmem:[%s5 + $0x18] sm:$0xf]
    %v263 = vld [vmem:[%s5 + $0x1c] sm:$0xf]
    %v264 = vld [vmem:[%s5 + $0x20] sm:$0xf]
    %v265 = vld [vmem:[%s5 + $0x24] sm:$0xf]
    %v266 = vld [vmem:[%s5 + $0x28] sm:$0xf]
    %v267 = vld [vmem:[%s5 + $0x2c] sm:$0xf]
    %v268 = vld [vmem:[%s5 + $0x30] sm:$0xf]
    %v269 = vld [vmem:[%s5 + $0x34] sm:$0xf]
    %v270 = vld [vmem:[%s5 + $0x38] sm:$0xf]
    %v271 = vld [vmem:[%s5 + $0x3c] sm:$0xf]
    %v272 = vld [vmem:[%s6] sm:$0x1]
    %v274 = vlaneseq
    %v275 = vshrl.u32 %v274, 7
    %v276 = vsub.s32 0, %v275
    %v277 = vrot.slane %v272, %v276
    %v295 = vunpack.c.l.b16 %v256
    %v296 = vunpack.c.l.b16 %v257
    %v297 = vunpack.c.l.b16 %v258
    %v298 = vunpack.c.l.b16 %v259
    %v299 = vunpack.c.l.b16 %v260
    %v300 = vunpack.c.l.b16 %v261
    %v301 = vunpack.c.l.b16 %v262
    %v302 = vunpack.c.l.b16 %v263
    %v303 = vunpack.c.l.b16 %v264
    %v304 = vunpack.c.l.b16 %v265
    %v305 = vunpack.c.l.b16 %v266
    %v306 = vunpack.c.l.b16 %v267
    %v307 = vunpack.c.l.b16 %v268
    %v308 = vunpack.c.l.b16 %v269
    %v309 = vunpack.c.l.b16 %v270
    %v310 = vunpack.c.l.b16 %v271
    %v311 = vpack.c.b16 %v296, %v295
    %v312 = vpack.c.b16 %v298, %v297
    %v313 = vpack.c.b16 %v300, %v299
    %v314 = vpack.c.b16 %v302, %v301
    %v315 = vpack.c.b16 %v304, %v303
    %v316 = vpack.c.b16 %v306, %v305
    %v317 = vpack.c.b16 %v308, %v307
    %v318 = vpack.c.b16 %v310, %v309
    %327 = vmatprep.subr.bf16.mxu0 0
    %328 = vmatpush1.bf16.msra.mxu0 %v311
    %329 = vmatprep.subr.bf16.mxu0 0
    %330 = vmatpush1.bf16.msra.mxu0 %v312
    %331 = vmatprep.subr.bf16.mxu0 0
    %332 = vmatpush1.bf16.msra.mxu0 %v313
    %333 = vmatprep.subr.bf16.mxu0 0
    %334 = vmatpush1.bf16.msra.mxu0 %v314
    %335 = vmatprep.subr.bf16.mxu0 0
    %336 = vmatpush1.bf16.msra.mxu0 %v315
    %337 = vmatprep.subr.bf16.mxu0 0
    %338 = vmatpush1.bf16.msra.mxu0 %v316
    %339 = vmatprep.subr.bf16.mxu0 0
    %340 = vmatpush1.bf16.msra.mxu0 %v317
    %341 = vmatprep.subr.bf16.mxu0 0
    %342 = vmatpush1.bf16.msra.mxu0 %v318
    %343 = vmatprep.subr.bf16.mxu0 0
    %344 = vmatpush1.bf16.msra.mxu0 0
    %345 = vmatprep.subr.bf16.mxu0 0
    %346 = vmatpush1.bf16.msra.mxu0 0
    %347 = vmatprep.subr.bf16.mxu0 0
    %348 = vmatpush1.bf16.msra.mxu0 0
    %349 = vmatprep.subr.bf16.mxu0 0
    %350 = vmatpush1.bf16.msra.mxu0 0
    %351 = vmatprep.subr.bf16.mxu0 0
    %352 = vmatpush1.bf16.msra.mxu0 0
    %353 = vmatprep.subr.bf16.mxu0 0
    %354 = vmatpush1.bf16.msra.mxu0 0
    %355 = vmatprep.subr.bf16.mxu0 0
    %356 = vmatpush1.bf16.msra.mxu0 0
    %357 = vmatprep.subr.bf16.mxu0 0
    %358 = vmatpush1.bf16.msra.mxu0 0
    %359 = vmatprep.mubr.bf16.mxu0 0
    %360 = vmatmul.mubr.bf16.gmra.mrb[0].mxu0 %v255
    %v361 = vpop.f32.mrb[0].mxu0
    %v362 = vadd.f32 %v277, %v361
    %v363 = vpop.f32.mrb[0].mxu0
    %v364 = vpop.f32.mrb[0].mxu0
    %v365 = vpop.f32.mrb[0].mxu0
    %366 = vdwg.mxu0
    %367 = vst [vmem:[#allocation2] sm:$0xff] %v362
    // Predicated region
    $region30: #{mlp_forward.1} parent=1 // pred_check
      _
    $region31: #{mlp_forward.1} parent=1 // pred_check_branch
      %369 = sbr.rel (0) target = $region33
    $region32: #{mlp_forward.1} parent=1 // pred_region
      %s371 = ssub.s32 128, 128
      %372 = vsyncadd [#allocation3], %s371
      %s374 = sshll.u32 [#allocation2], 4
      %s375 = int_to_ptr.vmem [resolvable:$true] %s374
      %377 = dma.vmem_to_hbm [thread:$0]  %s375, 128, %s7, [#allocation3]
    $region33: #{mlp_forward.1} parent=1 // pred_fallthru
      _
    // Predicated region
    $region34: #{mlp_forward.1} parent=1 // pred_check
      _
    $region35: #{mlp_forward.1} parent=1 // pred_check_branch
      %379 = sbr.rel (0) target = $region37
    $region36: #{mlp_forward.1} parent=1 // pred_region
      %380 = dma.done [#allocation3], 128
    $region37: #{mlp_forward.1} parent=1 // pred_fallthru
      _
    %381 = vsyncpa [#allocation3], 1

</llo_original>
